<compile_context>
chip_gen: v5e
topology: v5e:2x2
jax: 0.10.0
libtpu: 0.0.40
codegen_flags: <defaults>
</compile_context>

<pallas_src>
import jax
import jax.numpy as jnp
from jax.experimental import pallas as pl
from jax.experimental.pallas import tpu as pltpu


# ----------------------------- Pallas kernel ------------------------------- #
def lstm_seq_kernel(wh_t_ref, xz_ref, h0_ref, c0_ref,
                    h_seq_ref, c_seq_ref,
                    h_sc, c_sc):
    """One recurrent LSTM step per grid iteration.

    wh_t_ref : (Hp, 4*Hp)  recurrent weights, VMEM-resident (same block each step)
    xz_ref   : (1, 1, 4*Hp) precomputed x@Wx^T + b for this time step (streamed)
    h0_ref/c0_ref : (1, Hp) initial state (read only at t == 0)
    h_seq_ref/c_seq_ref : (1, 1, Hp) per-step outputs
    h_sc/c_sc : (1, Hp) f32 VMEM scratch carrying the recurrent state
    """
    t = pl.program_id(0)

    @pl.when(t == 0)
    def _():
        h_sc[...] = h0_ref[...]
        c_sc[...] = c0_ref[...]

    Hp = h_sc.shape[-1]
    h = h_sc[...]                                            # (1, Hp) f32
    c = c_sc[...]                                            # (1, Hp) f32

    # z = h @ Wh^T + (x @ Wx^T + b);  lane blocks of z: [f | i | c~ | o]
    z = (jnp.dot(h.astype(wh_t_ref.dtype), wh_t_ref[...],
                 preferred_element_type=jnp.float32)
         + xz_ref[0])                                        # (1, 4*Hp) f32

    # One sigmoid issue over the contiguous [f, i] lane range, then o.
    s_fi = jax.nn.sigmoid(z[:, 0:2 * Hp])
    ft = s_fi[:, 0:Hp]
    it = s_fi[:, Hp:2 * Hp]
    ctd = jnp.tanh(z[:, 2 * Hp:3 * Hp])
    ot = jax.nn.sigmoid(z[:, 3 * Hp:4 * Hp])

    cx = ft * c + it * ctd
    hx = ot * jnp.tanh(cx)

    h_sc[...] = hx
    c_sc[...] = cx
    h_seq_ref[0] = hx                                        # lane-dense store
    c_seq_ref[0] = cx


# ----------------------- one-time parameter fusion -------------------------- #
def fuse_lstm_params(params, weight_dtype=jnp.float32, lane_pad=128):
    """Fuse/pad/transpose the 8 LSTM params ONCE (hoisted out of the step fn).

    Returns pre-transposed, lane-padded weights:
      wh_t : (Hp, 4*Hp)  recurrent part  (h @ wh_t)
      wx_t : (Hp, 4*Hp)  input part      (x @ wx_t)
      b_row: (1, 4*Hp)   fused bias (f32)
    Gate order along the 4*Hp lane axis: f, i, c~, o; each gate starts at a
    multiple of Hp (=128) so in-kernel slices/stores are lane-aligned.
    """
    wf, bf, wi, bi, wc, bc, wo, bo = params
    H = wf.shape[0]
    Hp = ((H + lane_pad - 1) // lane_pad) * lane_pad

    def pad_gate_t(w_gate):                    # (H, H) -> (Hp, Hp), transposed
        return jnp.zeros((Hp, Hp), jnp.float32).at[:H, :H].set(w_gate.T)

    def pad_bias(b):
        return jnp.zeros((Hp,), jnp.float32).at[:H].set(b)

    gates_w = (wf, wi, wc, wo)
    gates_b = (bf, bi, bc, bo)
    wh_t = jnp.concatenate([pad_gate_t(w[:, :H]) for w in gates_w], axis=1)
    wx_t = jnp.concatenate([pad_gate_t(w[:, H:]) for w in gates_w], axis=1)
    b_row = jnp.concatenate([pad_bias(b) for b in gates_b]).reshape(1, 4 * Hp)

    return dict(
        wh_t=wh_t.astype(weight_dtype),        # MXU operands may be bf16
        wx_t=wx_t.astype(weight_dtype),
        b_row=b_row,                           # bias / gate math stay f32
        H=H, Hp=Hp, weight_dtype=weight_dtype,
    )


# ------------------------------ Python wrappers ----------------------------- #
def my_lstm(x_seq, h0, c0, fused):
    """Run T recurrent LSTM steps inside ONE pallas_call.

    x_seq: (T, H); h0, c0: (H,).  Returns (h_seq, c_seq), each (T, H) f32.
    """
    H, Hp = fused["H"], fused["Hp"]
    wdt = fused["weight_dtype"]
    T = x_seq.shape[0]

    # Input projection for the whole sequence as ONE GEMM (outside the loop):
    # only h @ Wh^T remains inside the per-step recurrent kernel.
    xp = jnp.zeros((T, Hp), jnp.float32).at[:, :H].set(x_seq.astype(jnp.float32))
    xz = (jnp.dot(xp.astype(wdt), fused["wx_t"],
                  preferred_element_type=jnp.float32,
                  precision=jax.lax.Precision.HIGHEST)
          + fused["b_row"])                                  # (T, 4*Hp) f32
    xz = xz.reshape(T, 1, 4 * Hp)

    h0p = jnp.zeros((1, Hp), jnp.float32).at[0, :H].set(h0.astype(jnp.float32))
    c0p = jnp.zeros((1, Hp), jnp.float32).at[0, :H].set(c0.astype(jnp.float32))

    wbytes = jnp.dtype(wdt).itemsize
    cost = pl.CostEstimate(
        flops=T * (2 * Hp * 4 * Hp + 10 * Hp),
        transcendentals=T * 5 * Hp,
        bytes_accessed=(wbytes * Hp * 4 * Hp          # resident weights (once)
                        + 4 * T * 4 * Hp              # streamed xz rows
                        + 4 * 2 * Hp                  # h0, c0
                        + 4 * 2 * T * Hp),            # h_seq, c_seq outputs
    )

    h_seq, c_seq = pl.pallas_call(
        lstm_seq_kernel,
        grid=(T,),
        in_specs=[
            # Recurrent weights: same block every step -> fetched once, resident.
            pl.BlockSpec((Hp, 4 * Hp), lambda t: (0, 0)),
            # Per-step input-projection row, streamed (double-buffered pipeline).
            pl.BlockSpec((1, 1, 4 * Hp), lambda t: (t, 0, 0)),
            pl.BlockSpec((1, Hp), lambda t: (0, 0)),
            pl.BlockSpec((1, Hp), lambda t: (0, 0)),
        ],
        out_specs=(pl.BlockSpec((1, 1, Hp), lambda t: (t, 0, 0)),
                   pl.BlockSpec((1, 1, Hp), lambda t: (t, 0, 0))),
        out_shape=(jax.ShapeDtypeStruct((T, 1, Hp), jnp.float32),
                   jax.ShapeDtypeStruct((T, 1, Hp), jnp.float32)),
        scratch_shapes=[pltpu.VMEM((1, Hp), jnp.float32),
                        pltpu.VMEM((1, Hp), jnp.float32)],
        compiler_params=pltpu.CompilerParams(
            dimension_semantics=("arbitrary",)),      # recurrence is sequential
        cost_estimate=cost,
    )(fused["wh_t"], xz, h0p, c0p)

    return h_seq[:, 0, :H], c_seq[:, 0, :H]


def my_lstm_cell(x, states_tuple, fused):
    """Single-step forward matching MyLSTMCell.forward (T == 1 of the kernel)."""
    h, c = states_tuple
    h_seq, c_seq = my_lstm(x[None, :], h, c, fused)
    return h_seq[0], c_seq[0]


# --------------------------- deterministic params --------------------------- #
def make_params():
    bc = jnp.array([1.16, 2.26, 1.16, 2.26], dtype=jnp.float32)
    bf = jnp.array([1.12, 2.22, 1.12, 2.22], dtype=jnp.float32)
    bi = jnp.array([1.14, 2.24, 1.14, 2.24], dtype=jnp.float32)
    bo = jnp.array([1.18, 2.28, 1.18, 2.28], dtype=jnp.float32)
    wc = jnp.array([[1.15, 2.25, 3.35, 4.45, 1.15, 2.25, 3.35, 4.45]] * 4, dtype=jnp.float32)
    wf = jnp.array([[1.10, 2.20, 3.30, 4.40, 1.10, 2.20, 3.30, 4.40]] * 4, dtype=jnp.float32)
    wi = jnp.array([[1.13, 2.23, 3.33, 4.43, 1.13, 2.23, 3.33, 4.43]] * 4, dtype=jnp.float32)
    wo = jnp.array([[1.17, 2.27, 3.37, 4.47, 1.17, 2.27, 3.37, 4.47]] * 4, dtype=jnp.float32)
    return wf, bf, wi, bi, wc, bc, wo, bo


# ----------------------------- pure-JAX references --------------------------- #
def reference_cell(x, h, c, params):
    wf, bf, wi, bi, wc, bc, wo, bo = params
    xc = jnp.concatenate([h, x])
    mm = lambda w: jnp.dot(w, xc, precision=jax.lax.Precision.HIGHEST)
    ft = jax.nn.sigmoid(mm(wf) + bf)
    it = jax.nn.sigmoid(mm(wi) + bi)
    ctd = jnp.tanh(mm(wc) + bc)
    cx = ft * c + it * ctd
    ot = jax.nn.sigmoid(mm(wo) + bo)
    hx = ot * jnp.tanh(cx)
    return hx, cx


def reference_sequence(x_seq, h0, c0, params, cast_dtype=None):
    """lax.scan reference; cast_dtype emulates the kernel's bf16 dot operands."""
    wf, bf, wi, bi, wc, bc, wo, bo = params
    if cast_dtype is None:
        q = lambda a: a
    else:
        q = lambda a: a.astype(cast_dtype).astype(jnp.float32)
    wfq, wiq, wcq, woq = q(wf), q(wi), q(wc), q(wo)

    def step(carry, x):
        h, c = carry
        xc = jnp.concatenate([q(h), q(x)])
        mm = lambda w: jnp.dot(w, xc, precision=jax.lax.Precision.HIGHEST)
        ft = jax.nn.sigmoid(mm(wfq) + bf)
        it = jax.nn.sigmoid(mm(wiq) + bi)
        ctd = jnp.tanh(mm(wcq) + bc)
        cx = ft * c + it * ctd
        ot = jax.nn.sigmoid(mm(woq) + bo)
        hx = ot * jnp.tanh(cx)
        return (hx, cx), (hx, cx)

    _, (hs, cs) = jax.lax.scan(step, (h0, c0), x_seq)
    return hs, cs


if __name__ == "__main__":
    H = 4     # hidden size implied by the torch module (weights are (4, 8))
    T = 8     # demonstration sequence length for the in-kernel recurrence

    key = jax.random.PRNGKey(0)
    kx, kh, kc, ks = jax.random.split(key, 4)
    x = jax.random.normal(kx, (H,), dtype=jnp.float32)
    h = jax.random.normal(kh, (H,), dtype=jnp.float32)
    c = jax.random.normal(kc, (H,), dtype=jnp.float32)
    x_seq = jax.random.normal(ks, (T, H), dtype=jnp.float32)

    params = make_params()

    # Fuse / pad / transpose the weights ONCE (hoisted out of the step fn).
    fused_f32 = fuse_lstm_params(params, weight_dtype=jnp.float32)

    # 1) Single-step forward == MyLSTMCell.forward (f32 weights, tight check).
    hx, cx = my_lstm_cell(x, (h, c), fused_f32)
    jax.block_until_ready((hx, cx))
    hx_ref, cx_ref = reference_cell(x, h, c, params)
    assert jnp.allclose(hx, hx_ref, atol=1e-4), (hx, hx_ref)
    assert jnp.allclose(cx, cx_ref, atol=1e-4), (cx, cx_ref)

    # 2) Full T-step recurrence inside one pallas_call (f32 weights).
    hs, cs = my_lstm(x_seq, h, c, fused_f32)
    jax.block_until_ready((hs, cs))
    hs_ref, cs_ref = reference_sequence(x_seq, h, c, params)
    assert jnp.allclose(hs, hs_ref, atol=1e-4), (hs, hs_ref)
    assert jnp.allclose(cs, cs_ref, atol=1e-4), (cs, cs_ref)

    # 3) bf16-weight MXU path (v6e/v7x); gate math stays f32.  Compared against
    #    a reference with identically bf16-quantized dot operands.
    fused_bf16 = fuse_lstm_params(params, weight_dtype=jnp.bfloat16)
    hs_b, cs_b = my_lstm(x_seq, h, c, fused_bf16)
    jax.block_until_ready((hs_b, cs_b))
    hs_q, cs_q = reference_sequence(x_seq, h, c, params, cast_dtype=jnp.bfloat16)
    assert jnp.allclose(hs_b, hs_q, atol=2e-3), (hs_b, hs_q)
    assert jnp.allclose(cs_b, cs_q, atol=2e-3), (cs_b, cs_q)

    print("KERNEL_OK")
</pallas_src>

<mosaic_0001>
module attributes {stable_mosaic.version = 11 : i64} {
  func.func @lstm_seq_kernel(%arg0: i32, %arg1: memref<128x512xf32, #tpu.memory_space<vmem>>, %arg2: memref<1x1x512xf32, #tpu.memory_space<vmem>>, %arg3: memref<1x128xf32, #tpu.memory_space<vmem>>, %arg4: memref<1x128xf32, #tpu.memory_space<vmem>>, %arg5: memref<1x1x128xf32, #tpu.memory_space<vmem>>, %arg6: memref<1x1x128xf32, #tpu.memory_space<vmem>>, %arg7: memref<1x128xf32, #tpu.memory_space<vmem>>, %arg8: memref<1x128xf32, #tpu.memory_space<vmem>>) attributes {dimension_semantics = [#tpu.dimension_semantics<arbitrary>], iteration_bounds = array<i64: 1>, scalar_prefetch = 0 : i64, scratch_operands = 2 : i64, tpu.core_type = #tpu.core_type<tc>, window_params = [{pipeline_mode = #tpu.pipeline_mode<synchronous>, transform_indices = @transform_0, window_bounds = array<i64: 128, 512>}, {transform_indices = @transform_1, window_bounds = array<i64: 1, 1, 512>}, {pipeline_mode = #tpu.pipeline_mode<synchronous>, transform_indices = @transform_2, window_bounds = array<i64: 1, 128>}, {pipeline_mode = #tpu.pipeline_mode<synchronous>, transform_indices = @transform_3, window_bounds = array<i64: 1, 128>}, {transform_indices = @transform_4, window_bounds = array<i64: 1, 1, 128>}, {transform_indices = @transform_5, window_bounds = array<i64: 1, 1, 128>}]} {
    %c0_i32 = arith.constant 0 : i32
    %0 = arith.cmpi eq, %arg0, %c0_i32 : i32
    %1 = arith.extui %0 : i1 to i32
    %c0_i32_0 = arith.constant 0 : i32
    %2 = arith.cmpi ne, %1, %c0_i32_0 : i32
    scf.if %2 {
      %c0_21 = arith.constant 0 : index
      %c0_22 = arith.constant 0 : index
      %39 = vector.load %arg3[%c0_21, %c0_22] : memref<1x128xf32, #tpu.memory_space<vmem>>, vector<1x128xf32>
      %c0_23 = arith.constant 0 : index
      %c0_24 = arith.constant 0 : index
      %40 = vector.load %arg7[%c0_23, %c0_24] : memref<1x128xf32, #tpu.memory_space<vmem>>, vector<1x128xf32>
      tpu.vector_store %arg7[%c0_23, %c0_24], %39 {strides = array<i32>} : memref<1x128xf32, #tpu.memory_space<vmem>>, vector<1x128xf32>,
      %c0_25 = arith.constant 0 : index
      %c0_26 = arith.constant 0 : index
      %41 = vector.load %arg4[%c0_25, %c0_26] : memref<1x128xf32, #tpu.memory_space<vmem>>, vector<1x128xf32>
      %c0_27 = arith.constant 0 : index
      %c0_28 = arith.constant 0 : index
      %42 = vector.load %arg8[%c0_27, %c0_28] : memref<1x128xf32, #tpu.memory_space<vmem>>, vector<1x128xf32>
      tpu.vector_store %arg8[%c0_27, %c0_28], %41 {strides = array<i32>} : memref<1x128xf32, #tpu.memory_space<vmem>>, vector<1x128xf32>,
    } else {
    }
    %c0 = arith.constant 0 : index
    %c0_1 = arith.constant 0 : index
    %3 = vector.load %arg7[%c0, %c0_1] : memref<1x128xf32, #tpu.memory_space<vmem>>, vector<1x128xf32>
    %c0_2 = arith.constant 0 : index
    %c0_3 = arith.constant 0 : index
    %4 = vector.load %arg8[%c0_2, %c0_3] : memref<1x128xf32, #tpu.memory_space<vmem>>, vector<1x128xf32>
    %c0_4 = arith.constant 0 : index
    %c0_5 = arith.constant 0 : index
    %5 = vector.load %arg1[%c0_4, %c0_5] : memref<128x512xf32, #tpu.memory_space<vmem>>, vector<128x512xf32>
    %cst = arith.constant dense<0.000000e+00> : vector<1x512xf32>
    %6 = tpu.matmul %3, %5, %cst {dimension_numbers = #tpu.dot_dimension_numbers<[1], [0], [0], [1], [0, 0, 1, 1], [], []>} : vector<1x128xf32>, vector<128x512xf32>, vector<1x512xf32> -> vector<1x512xf32>
    %c0_6 = arith.constant 0 : index
    %c0_7 = arith.constant 0 : index
    %c0_8 = arith.constant 0 : index
    %7 = vector.load %arg2[%c0_6, %c0_7, %c0_8] : memref<1x1x512xf32, #tpu.memory_space<vmem>>, vector<1x1x512xf32>
    %8 = vector.shape_cast %7 : vector<1x1x512xf32> to vector<1x512xf32>
    %9 = arith.addf %6, %8 : vector<1x512xf32>
    %10 = vector.extract_strided_slice %9 {offsets = [0, 0], sizes = [1, 256], strides = [1, 1]} : vector<1x512xf32> to vector<1x256xf32>
    %11 = arith.negf %10 : vector<1x256xf32>
    %12 = math.exp %11 : vector<1x256xf32>
    %cst_9 = arith.constant 1.000000e+00 : f32
    %13 = vector.broadcast %cst_9 : f32 to vector<1x256xf32>
    %14 = arith.addf %13, %12 : vector<1x256xf32>
    %15 = arith.divf %13, %14 : vector<1x256xf32>
    %16 = vector.extract_strided_slice %15 {offsets = [0, 0], sizes = [1, 128], strides = [1, 1]} : vector<1x256xf32> to vector<1x128xf32>
    %17 = vector.extract_strided_slice %15 {offsets = [0, 128], sizes = [1, 128], strides = [1, 1]} : vector<1x256xf32> to vector<1x128xf32>
    %18 = vector.extract_strided_slice %9 {offsets = [0, 256], sizes = [1, 128], strides = [1, 1]} : vector<1x512xf32> to vector<1x128xf32>
    %19 = math.tanh %18 : vector<1x128xf32>
    %20 = vector.extract_strided_slice %9 {offsets = [0, 384], sizes = [1, 128], strides = [1, 1]} : vector<1x512xf32> to vector<1x128xf32>
    %21 = arith.negf %20 : vector<1x128xf32>
    %22 = math.exp %21 : vector<1x128xf32>
    %cst_10 = arith.constant 1.000000e+00 : f32
    %23 = vector.broadcast %cst_10 : f32 to vector<1x128xf32>
    %24 = arith.addf %23, %22 : vector<1x128xf32>
    %25 = arith.divf %23, %24 : vector<1x128xf32>
    %26 = arith.mulf %16, %4 : vector<1x128xf32>
    %27 = arith.mulf %17, %19 : vector<1x128xf32>
    %28 = arith.addf %26, %27 : vector<1x128xf32>
    %29 = math.tanh %28 : vector<1x128xf32>
    %30 = arith.mulf %25, %29 : vector<1x128xf32>
    %c0_11 = arith.constant 0 : index
    %c0_12 = arith.constant 0 : index
    %31 = vector.load %arg7[%c0_11, %c0_12] : memref<1x128xf32, #tpu.memory_space<vmem>>, vector<1x128xf32>
    tpu.vector_store %arg7[%c0_11, %c0_12], %30 {strides = array<i32>} : memref<1x128xf32, #tpu.memory_space<vmem>>, vector<1x128xf32>,
    %c0_13 = arith.constant 0 : index
    %c0_14 = arith.constant 0 : index
    %32 = vector.load %arg8[%c0_13, %c0_14] : memref<1x128xf32, #tpu.memory_space<vmem>>, vector<1x128xf32>
    tpu.vector_store %arg8[%c0_13, %c0_14], %28 {strides = array<i32>} : memref<1x128xf32, #tpu.memory_space<vmem>>, vector<1x128xf32>,
    %c0_15 = arith.constant 0 : index
    %c0_16 = arith.constant 0 : index
    %c0_17 = arith.constant 0 : index
    %33 = vector.load %arg5[%c0_15, %c0_16, %c0_17] : memref<1x1x128xf32, #tpu.memory_space<vmem>>, vector<1x1x128xf32>
    %34 = vector.shape_cast %33 : vector<1x1x128xf32> to vector<1x128xf32>
    %35 = vector.shape_cast %30 : vector<1x128xf32> to vector<1x1x128xf32>
    tpu.vector_store %arg5[%c0_15, %c0_16, %c0_17], %35 {strides = array<i32>} : memref<1x1x128xf32, #tpu.memory_space<vmem>>, vector<1x1x128xf32>,
    %c0_18 = arith.constant 0 : index
    %c0_19 = arith.constant 0 : index
    %c0_20 = arith.constant 0 : index
    %36 = vector.load %arg6[%c0_18, %c0_19, %c0_20] : memref<1x1x128xf32, #tpu.memory_space<vmem>>, vector<1x1x128xf32>
    %37 = vector.shape_cast %36 : vector<1x1x128xf32> to vector<1x128xf32>
    %38 = vector.shape_cast %28 : vector<1x128xf32> to vector<1x1x128xf32>
    tpu.vector_store %arg6[%c0_18, %c0_19, %c0_20], %38 {strides = array<i32>} : memref<1x1x128xf32, #tpu.memory_space<vmem>>, vector<1x1x128xf32>,
    return
  }
  func.func @transform_0(%arg0: i32) -> (i32, i32) {
    %c0_i32 = arith.constant 0 : i32
    %c0_i32_0 = arith.constant 0 : i32
    %c0_i32_1 = arith.constant 0 : i32
    return %c0_i32, %c0_i32_0 : i32, i32
  }
  func.func @transform_1(%arg0: i32) -> (i32, i32, i32) {
    %c0_i32 = arith.constant 0 : i32
    %c0_i32_0 = arith.constant 0 : i32
    %c0_i32_1 = arith.constant 0 : i32
    return %arg0, %c0_i32, %c0_i32_0 : i32, i32, i32
  }
  func.func @transform_2(%arg0: i32) -> (i32, i32) {
    %c0_i32 = arith.constant 0 : i32
    %c0_i32_0 = arith.constant 0 : i32
    %c0_i32_1 = arith.constant 0 : i32
    return %c0_i32, %c0_i32_0 : i32, i32
  }
  func.func @transform_3(%arg0: i32) -> (i32, i32) {
    %c0_i32 = arith.constant 0 : i32
    %c0_i32_0 = arith.constant 0 : i32
    %c0_i32_1 = arith.constant 0 : i32
    return %c0_i32, %c0_i32_0 : i32, i32
  }
  func.func @transform_4(%arg0: i32) -> (i32, i32, i32) {
    %c0_i32 = arith.constant 0 : i32
    %c0_i32_0 = arith.constant 0 : i32
    %c0_i32_1 = arith.constant 0 : i32
    return %arg0, %c0_i32, %c0_i32_0 : i32, i32, i32
  }
  func.func @transform_5(%arg0: i32) -> (i32, i32, i32) {
    %c0_i32 = arith.constant 0 : i32
    %c0_i32_0 = arith.constant 0 : i32
    %c0_i32_1 = arith.constant 0 : i32
    return %arg0, %c0_i32, %c0_i32_0 : i32, i32, i32
  }
}

</mosaic_0001>

<llo_original>
// kernel: tpu_custom_call.1
$region0: #{tpu_custom_call.1}
  #allocation0 [shape = 'u32[]', space=smem, size = 0x4, offset = 0x4, fixed_abs, tag = 'smem constant byte address 0x4 - core index']
  #allocation1 [shape = 'u32[72,128]{1,0:T(1,128)}', space=vmem, size = 0x9000, scoped, tag = 'internal scratch']
  #allocation2 [shape = 'f32[1,128]{1,0:T(1,128)}', space=vmem, size = 0x200, scoped, tag = 'scratch operand']
  #allocation3 [shape = 'f32[1,128]{1,0:T(1,128)}', space=vmem, size = 0x200, scoped, tag = 'scratch operand']
  %s0 = inlined_call_operand.hbm [shape: f32[128,512], index: 0, kind: input, shape index: {}]
  %s1 = inlined_call_operand.hbm [shape: f32[1,1,512], index: 1, kind: input, shape index: {}]
  %s2 = inlined_call_operand.vmem [shape: f32[1,128], index: 2, kind: input, shape index: {}]
  %s3 = inlined_call_operand.vmem [shape: f32[1,128], index: 3, kind: input, shape index: {}]
  %s4 = inlined_call_operand.hbm [shape: f32[1,1,128], index: 4, kind: output, shape index: {0}]
  %s5 = inlined_call_operand.hbm [shape: f32[1,1,128], index: 5, kind: output, shape index: {1}]
  %6 = xla_tuple %s4, %s5
  %s7 = sld [smem:[#allocation0]]
  $region46: #{tpu_custom_call.1} parent=0
    _
  %s9 = ssub.s32 1, %s7
  %s10 = scalar_select 0, %s9, %s7
  $region1: #{tpu_custom_call.1} parent=0
    #allocation4 [shape = 'u8[262144]{0}', space=vmem, size = 0x40000, scoped, tag = 'input window, operand 0, single buffered']
    #allocation5 [shape = 's32[1]{0}', space=sflag, size = 0x4, scoped, tag = 'scoped memory for tpu_custom_call.1']
    #allocation6 [shape = 's32[1]{0}', space=sflag, size = 0x4, scoped, tag = 'scoped memory for tpu_custom_call.1']
    #allocation7 [shape = 'u8[2048]{0}', space=vmem, size = 0x800, scoped, tag = 'input window, operand 1, single buffered']
    #allocation8 [shape = 's32[1]{0}', space=sflag, size = 0x4, scoped, tag = 'scoped memory for tpu_custom_call.1']
    #allocation9 [shape = 'u8[512]{0}', space=vmem, size = 0x400, scoped, tag = 'output window, operand 0, single buffered']
    #allocation10 [shape = 'u8[512]{0}', space=vmem, size = 0x400, scoped, tag = 'output window, operand 1, single buffered']
    #allocation11 [shape = 's32[1]{0}', space=sflag, size = 0x4, scoped, tag = 'scoped memory for tpu_custom_call.1']
    %11 = vsyncpa [#allocation5], 0
    %12 = vsyncpa [#allocation8], 0
    %13 = vsyncpa [#allocation6], 0
    %14 = vsyncpa [#allocation11], 0
    // Predicated region
    $region2: #{tpu_custom_call.1} parent=1 // pred_check
      _
    $region3: #{tpu_custom_call.1} parent=1 // pred_check_branch
      %16 = sbr.rel (0) target = $region5
    $region4: #{tpu_custom_call.1} parent=1 // pred_region
      %18 = vsyncadd [#allocation5], 0
      %s19 = sshll.u32 %s0, 4
      %s20 = int_to_ptr.hbm [resolvable:$true] %s19
      %s21 = sshll.u32 [#allocation4], 4
      %s22 = int_to_ptr.vmem [resolvable:$true] %s21
      %27 = dma.hbm_to_vmem [thread:$0]  %s20, 8192, %s22, [#allocation5], 512, 512, 32
    $region5: #{tpu_custom_call.1} parent=1 // pred_fallthru
      _
    // Predicated region
    $region6: #{tpu_custom_call.1} parent=1 // pred_check
      _
    $region7: #{tpu_custom_call.1} parent=1 // pred_check_branch
      %29 = sbr.rel (0) target = $region9
    $region8: #{tpu_custom_call.1} parent=1 // pred_region
      %31 = vsyncadd [#allocation8], 0
      %s33 = sshll.u32 %s1, 4
      %s34 = int_to_ptr.hbm [resolvable:$true] %s33
      %s35 = sshll.u32 [#allocation7], 4
      %s36 = int_to_ptr.vmem [resolvable:$true] %s35
      %38 = dma.hbm_to_vmem [thread:$0]  %s34, 64, %s36, [#allocation8]
    $region9: #{tpu_custom_call.1} parent=1 // pred_fallthru
      _
    // Predicated region
    $region10: #{tpu_custom_call.1} parent=1 // pred_check
      _
    $region11: #{tpu_custom_call.1} parent=1 // pred_check_branch
      %40 = sbr.rel (0) target = $region13
    $region12: #{tpu_custom_call.1} parent=1 // pred_region
      _
    $region13: #{tpu_custom_call.1} parent=1 // pred_fallthru
      _
    // Predicated region
    $region14: #{tpu_custom_call.1} parent=1 // pred_check
      _
    $region15: #{tpu_custom_call.1} parent=1 // pred_check_branch
      %42 = sbr.rel (0) target = $region17
    $region16: #{tpu_custom_call.1} parent=1 // pred_region
      _
    $region17: #{tpu_custom_call.1} parent=1 // pred_fallthru
      _
    // Predicated region
    $region18: #{tpu_custom_call.1} parent=1 // pred_check
      _
    $region19: #{tpu_custom_call.1} parent=1 // pred_check_branch
      %44 = sbr.rel (0) target = $region21
    $region20: #{tpu_custom_call.1} parent=1 // pred_region
      %46 = dma.done [#allocation5], 8192
    $region21: #{tpu_custom_call.1} parent=1 // pred_fallthru
      _
    // Predicated region
    $region22: #{tpu_custom_call.1} parent=1 // pred_check
      _
    $region23: #{tpu_custom_call.1} parent=1 // pred_check_branch
      %48 = sbr.rel (0) target = $region25
    $region24: #{tpu_custom_call.1} parent=1 // pred_region
      %50 = dma.done [#allocation8], 64
    $region25: #{tpu_custom_call.1} parent=1 // pred_fallthru
      _
    %p51 = scmp.eq.s32.totalorder 0, 0
    // Predicated region
    $region26: #{tpu_custom_call.1} parent=1 // pred_check
      %p52 = pneg %p51
    $region27: #{tpu_custom_call.1} parent=1 // pred_check_branch
      %54 = sbr.rel (%p52) target = $region29
    $region28: #{tpu_custom_call.1} parent=1 // pred_region
      %v55 = vld [vmem:[%s2] sm:$0x1]
      %56 = vst [vmem:[#allocation2] sm:$0x1] %v55
      %v57 = vld [vmem:[%s3] sm:$0x1]
      %58 = vst [vmem:[#allocation3] sm:$0x1] %v57
    $region29: #{tpu_custom_call.1} parent=1 // pred_fallthru
      _
    %v59 = vld [vmem:[#allocation2] sm:$0x1]
    %v60 = vld [vmem:[#allocation3] sm:$0x1]
    %v61 = vld [vmem:[#allocation4] sm:$0xff]
    %v62 = vld [vmem:[#allocation4 + $0x8] sm:$0xff]
    %v63 = vld [vmem:[#allocation4 + $0x10] sm:$0xff]
    %v64 = vld [vmem:[#allocation4 + $0x18] sm:$0xff]
    %v65 = vld [vmem:[#allocation4 + $0x20] sm:$0xff]
    %v66 = vld [vmem:[#allocation4 + $0x28] sm:$0xff]
    %v67 = vld [vmem:[#allocation4 + $0x30] sm:$0xff]
    %v68 = vld [vmem:[#allocation4 + $0x38] sm:$0xff]
    %v69 = vld [vmem:[#allocation4 + $0x40] sm:$0xff]
    %v70 = vld [vmem:[#allocation4 + $0x48] sm:$0xff]
    %v71 = vld [vmem:[#allocation4 + $0x50] sm:$0xff]
    %v72 = vld [vmem:[#allocation4 + $0x58] sm:$0xff]
    %v73 = vld [vmem:[#allocation4 + $0x60] sm:$0xff]
    %v74 = vld [vmem:[#allocation4 + $0x68] sm:$0xff]
    %v75 = vld [vmem:[#allocation4 + $0x70] sm:$0xff]
    %v76 = vld [vmem:[#allocation4 + $0x78] sm:$0xff]
    %v77 = vld [vmem:[#allocation4 + $0x80] sm:$0xff]
    %v78 = vld [vmem:[#allocation4 + $0x88] sm:$0xff]
    %v79 = vld [vmem:[#allocation4 + $0x90] sm:$0xff]
    %v80 = vld [vmem:[#allocation4 + $0x98] sm:$0xff]
    %v81 = vld [vmem:[#allocation4 + $0xa0] sm:$0xff]
    %v82 = vld [vmem:[#allocation4 + $0xa8] sm:$0xff]
    %v83 = vld [vmem:[#allocation4 + $0xb0] sm:$0xff]
    %v84 = vld [vmem:[#allocation4 + $0xb8] sm:$0xff]
    %v85 = vld [vmem:[#allocation4 + $0xc0] sm:$0xff]
    %v86 = vld [vmem:[#allocation4 + $0xc8] sm:$0xff]
    %v87 = vld [vmem:[#allocation4 + $0xd0] sm:$0xff]
    %v88 = vld [vmem:[#allocation4 + $0xd8] sm:$0xff]
    %v89 = vld [vmem:[#allocation4 + $0xe0] sm:$0xff]
    %v90 = vld [vmem:[#allocation4 + $0xe8] sm:$0xff]
    %v91 = vld [vmem:[#allocation4 + $0xf0] sm:$0xff]
    %v92 = vld [vmem:[#allocation4 + $0xf8] sm:$0xff]
    %v93 = vld [vmem:[#allocation4 + $0x100] sm:$0xff]
    %v94 = vld [vmem:[#allocation4 + $0x108] sm:$0xff]
    %v95 = vld [vmem:[#allocation4 + $0x110] sm:$0xff]
    %v96 = vld [vmem:[#allocation4 + $0x118] sm:$0xff]
    %v97 = vld [vmem:[#allocation4 + $0x120] sm:$0xff]
    %v98 = vld [vmem:[#allocation4 + $0x128] sm:$0xff]
    %v99 = vld [vmem:[#allocation4 + $0x130] sm:$0xff]
    %v100 = vld [vmem:[#allocation4 + $0x138] sm:$0xff]
    %v101 = vld [vmem:[#allocation4 + $0x140] sm:$0xff]
    %v102 = vld [vmem:[#allocation4 + $0x148] sm:$0xff]
    %v103 = vld [vmem:[#allocation4 + $0x150] sm:$0xff]
    %v104 = vld [vmem:[#allocation4 + $0x158] sm:$0xff]
    %v105 = vld [vmem:[#allocation4 + $0x160] sm:$0xff]
    %v106 = vld [vmem:[#allocation4 + $0x168] sm:$0xff]
    %v107 = vld [vmem:[#allocation4 + $0x170] sm:$0xff]
    %v108 = vld [vmem:[#allocation4 + $0x178] sm:$0xff]
    %v109 = vld [vmem:[#allocation4 + $0x180] sm:$0xff]
    %v110 = vld [vmem:[#allocation4 + $0x188] sm:$0xff]
    %v111 = vld [vmem:[#allocation4 + $0x190] sm:$0xff]
    %v112 = vld [vmem:[#allocation4 + $0x198] sm:$0xff]
    %v113 = vld [vmem:[#allocation4 + $0x1a0] sm:$0xff]
    %v114 = vld [vmem:[#allocation4 + $0x1a8] sm:$0xff]
    %v115 = vld [vmem:[#allocation4 + $0x1b0] sm:$0xff]
    %v116 = vld [vmem:[#allocation4 + $0x1b8] sm:$0xff]
    %v117 = vld [vmem:[#allocation4 + $0x1c0] sm:$0xff]
    %v118 = vld [vmem:[#allocation4 + $0x1c8] sm:$0xff]
    %v119 = vld [vmem:[#allocation4 + $0x1d0] sm:$0xff]
    %v120 = vld [vmem:[#allocation4 + $0x1d8] sm:$0xff]
    %v121 = vld [vmem:[#allocation4 + $0x1e0] sm:$0xff]
    %v122 = vld [vmem:[#allocation4 + $0x1e8] sm:$0xff]
    %v123 = vld [vmem:[#allocation4 + $0x1f0] sm:$0xff]
    %v124 = vld [vmem:[#allocation4 + $0x1f8] sm:$0xff]
    %v125 = vld [vmem:[#allocation7] sm:$0xf]
    %v127 = vperm.slane %v125, 0
    %v128 = vperm.slane %v125, 1
    %v129 = vperm.slane %v125, 2
    %v130 = vperm.slane %v125, 3
    %135 = vmatpush.msra.mxu0 %v121
    %136 = vmatpush.msra.mxu0 %v117
    %137 = vmatpush.msra.mxu0 %v113
    %138 = vmatpush.msra.mxu0 %v109
    %139 = vmatpush.msra.mxu0 %v105
    %140 = vmatpush.msra.mxu0 %v101
    %141 = vmatpush.msra.mxu0 %v97
    %142 = vmatpush.msra.mxu0 %v93
    %143 = vmatpush.msra.mxu0 %v89
    %144 = vmatpush.msra.mxu0 %v85
    %145 = vmatpush.msra.mxu0 %v81
    %146 = vmatpush.msra.mxu0 %v77
    %147 = vmatpush.msra.mxu0 %v73
    %148 = vmatpush.msra.mxu0 %v69
    %149 = vmatpush.msra.mxu0 %v65
    %150 = vmatpush.msra.mxu0 %v61
    %151 = vmatmul.f32.gmra.mxu0 %v59
    %v152 = vpop.f32.mrf.mxu0
    %v153 = vadd.f32 %v127, %v152
    %154 = vdwg.mxu0
    %155 = vmatpush.msra.mxu0 %v122
    %156 = vmatpush.msra.mxu0 %v118
    %157 = vmatpush.msra.mxu0 %v114
    %158 = vmatpush.msra.mxu0 %v110
    %159 = vmatpush.msra.mxu0 %v106
    %160 = vmatpush.msra.mxu0 %v102
    %161 = vmatpush.msra.mxu0 %v98
    %162 = vmatpush.msra.mxu0 %v94
    %163 = vmatpush.msra.mxu0 %v90
    %164 = vmatpush.msra.mxu0 %v86
    %165 = vmatpush.msra.mxu0 %v82
    %166 = vmatpush.msra.mxu0 %v78
    %167 = vmatpush.msra.mxu0 %v74
    %168 = vmatpush.msra.mxu0 %v70
    %169 = vmatpush.msra.mxu0 %v66
    %170 = vmatpush.msra.mxu0 %v62
    %171 = vmatmul.f32.gmra.mxu0 %v59
    %v172 = vpop.f32.mrf.mxu0
    %v173 = vadd.f32 %v128, %v172
    %174 = vdwg.mxu0
    %175 = vmatpush.msra.mxu0 %v123
    %176 = vmatpush.msra.mxu0 %v119
    %177 = vmatpush.msra.mxu0 %v115
    %178 = vmatpush.msra.mxu0 %v111
    %179 = vmatpush.msra.mxu0 %v107
    %180 = vmatpush.msra.mxu0 %v103
    %181 = vmatpush.msra.mxu0 %v99
    %182 = vmatpush.msra.mxu0 %v95
    %183 = vmatpush.msra.mxu0 %v91
    %184 = vmatpush.msra.mxu0 %v87
    %185 = vmatpush.msra.mxu0 %v83
    %186 = vmatpush.msra.mxu0 %v79
    %187 = vmatpush.msra.mxu0 %v75
    %188 = vmatpush.msra.mxu0 %v71
    %189 = vmatpush.msra.mxu0 %v67
    %190 = vmatpush.msra.mxu0 %v63
    %191 = vmatmul.f32.gmra.mxu0 %v59
    %v192 = vpop.f32.mrf.mxu0
    %v193 = vadd.f32 %v129, %v192
    %194 = vdwg.mxu0
    %195 = vmatpush.msra.mxu0 %v124
    %196 = vmatpush.msra.mxu0 %v120
    %197 = vmatpush.msra.mxu0 %v116
    %198 = vmatpush.msra.mxu0 %v112
    %199 = vmatpush.msra.mxu0 %v108
    %200 = vmatpush.msra.mxu0 %v104
    %201 = vmatpush.msra.mxu0 %v100
    %202 = vmatpush.msra.mxu0 %v96
    %203 = vmatpush.msra.mxu0 %v92
    %204 = vmatpush.msra.mxu0 %v88
    %205 = vmatpush.msra.mxu0 %v84
    %206 = vmatpush.msra.mxu0 %v80
    %207 = vmatpush.msra.mxu0 %v76
    %208 = vmatpush.msra.mxu0 %v72
    %209 = vmatpush.msra.mxu0 %v68
    %210 = vmatpush.msra.mxu0 %v64
    %211 = vmatmul.f32.gmra.mxu0 %v59
    %v212 = vpop.f32.mrf.mxu0
    %v213 = vadd.f32 %v130, %v212
    %214 = vdwg.mxu0
    %v215 = vxor.u32 %v153, 2147483648
    %v216 = vxor.u32 %v173, 2147483648
    %v217 = vmul.f32 %v215, 1.442695
    %v218 = vpow.pop %v217
    %v219 = vmul.f32 %v216, 1.442695
    %v220 = vpow.pop %v219
    %v221 = vadd.f32 %v218, 1.0
    %v222 = vadd.f32 %v220, 1.0
    %v223 = vrcp.pop %v221
    %v224 = vmul.f32 %v221, %v223
    %v225 = vsub.f32 1.0, %v224
    %v226 = vmul.f32 %v223, %v225
    %v227 = vadd.f32 %v223, %v226
    %vm228 = vweird.f32 %v221
    %vm229 = vweird.f32 %v223
    %vm230 = vmor %vm228, %vm229
    %v231 = vsel %vm230, %v223, %v227
    %v232 = vand.u32 2147483647, %v221
    %vm233 = vcmp.eq.f32.partialorder %v232, 8.507059e+37
    %v234 = vand.u32 %v221, 2147483648
    %v235 = vor.u32 1.1754944e-38, %v234
    %v236 = vsel %vm233, %v235, %v231
    %v237 = vmul.f32 1.0, %v236
    %v238 = vrcp.pop %v222
    %v239 = vmul.f32 %v222, %v238
    %v240 = vsub.f32 1.0, %v239
    %v241 = vmul.f32 %v238, %v240
    %v242 = vadd.f32 %v238, %v241
    %vm243 = vweird.f32 %v222
    %vm244 = vweird.f32 %v238
    %vm245 = vmor %vm243, %vm244
    %v246 = vsel %vm245, %v238, %v242
    %v247 = vand.u32 2147483647, %v222
    %vm248 = vcmp.eq.f32.partialorder %v247, 8.507059e+37
    %v249 = vand.u32 %v222, 2147483648
    %v250 = vor.u32 1.1754944e-38, %v249
    %v251 = vsel %vm248, %v250, %v246
    %v252 = vmul.f32 1.0, %v251
    %v253 = vtanh.pop %v193
    %v254 = vxor.u32 %v213, 2147483648
    %v255 = vmul.f32 %v254, 1.442695
    %v256 = vpow.pop %v255
    %v257 = vadd.f32 %v256, 1.0
    %v258 = vrcp.pop %v257
    %v259 = vmul.f32 %v257, %v258
    %v260 = vsub.f32 1.0, %v259
    %v261 = vmul.f32 %v258, %v260
    %v262 = vadd.f32 %v258, %v261
    %vm263 = vweird.f32 %v257
    %vm264 = vweird.f32 %v258
    %vm265 = vmor %vm263, %vm264
    %v266 = vsel %vm265, %v258, %v262
    %v267 = vand.u32 2147483647, %v257
    %vm268 = vcmp.eq.f32.partialorder %v267, 8.507059e+37
    %v269 = vand.u32 %v257, 2147483648
    %v270 = vor.u32 1.1754944e-38, %v269
    %v271 = vsel %vm268, %v270, %v266
    %v272 = vmul.f32 1.0, %v271
    %v273 = vmul.f32 %v237, %v60
    %v274 = vmul.f32 %v252, %v253
    %v275 = vadd.f32 %v273, %v274
    %v276 = vtanh.pop %v275
    %v277 = vmul.f32 %v272, %v276
    %278 = vst [vmem:[#allocation2] sm:$0x1] %v277
    %279 = vst [vmem:[#allocation3] sm:$0x1] %v275
    %280 = vst [vmem:[#allocation9] sm:$0x1] %v277
    %281 = vst [vmem:[#allocation10] sm:$0x1] %v275
    // Predicated region
    $region30: #{tpu_custom_call.1} parent=1 // pred_check
      _
    $region31: #{tpu_custom_call.1} parent=1 // pred_check_branch
      %283 = sbr.rel (0) target = $region33
    $region32: #{tpu_custom_call.1} parent=1 // pred_region
      %285 = vsyncadd [#allocation6], 0
      %s287 = sshll.u32 [#allocation9], 4
      %s288 = int_to_ptr.vmem [resolvable:$true] %s287
      %s289 = sshll.u32 %s4, 4
      %s290 = int_to_ptr.hbm [resolvable:$true] %s289
      %292 = dma.vmem_to_hbm [thread:$0]  %s288, 16, %s290, [#allocation6]
    $region33: #{tpu_custom_call.1} parent=1 // pred_fallthru
      _
    // Predicated region
    $region34: #{tpu_custom_call.1} parent=1 // pred_check
      _
    $region35: #{tpu_custom_call.1} parent=1 // pred_check_branch
      %294 = sbr.rel (0) target = $region37
    $region36: #{tpu_custom_call.1} parent=1 // pred_region
      %296 = vsyncadd [#allocation11], 0
      %s298 = sshll.u32 [#allocation10], 4
      %s299 = int_to_ptr.vmem [resolvable:$true] %s298
      %s300 = sshll.u32 %s5, 4
      %s301 = int_to_ptr.hbm [resolvable:$true] %s300
      %303 = dma.vmem_to_hbm [thread:$0]  %s299, 16, %s301, [#allocation11]
    $region37: #{tpu_custom_call.1} parent=1 // pred_fallthru
      _
    // Predicated region
    $region38: #{tpu_custom_call.1} parent=1 // pred_check
      _
    $region39: #{tpu_custom_call.1} parent=1 // pred_check_branch
      %305 = sbr.rel (0) target = $region41
    $region40: #{tpu_custom_call.1} parent=1 // pred_region
      %307 = dma.done [#allocation6], 16
    $region41: #{tpu_custom_call.1} parent=1 // pred_fallthru
      _
    // Predicated region
    $region42: #{tpu_custom_call.1} parent=1 // pred_check
      _
    $region43: #{tpu_custom_call.1} parent=1 // pred_check_branch
      %309 = sbr.rel (0) target = $region45
    $region44: #{tpu_custom_call.1} parent=1 // pred_region
      %311 = dma.done [#allocation11], 16
    $region45: #{tpu_custom_call.1} parent=1 // pred_fallthru
      _
    %312 = vsyncpa [#allocation5], 1
    %313 = vsyncpa [#allocation8], 1
    %314 = vsyncpa [#allocation6], 1
    %315 = vsyncpa [#allocation11], 1

</llo_original>
